<compile_context>
chip_gen: v6e
topology: v6e:2x2x1
jax: 0.10.0
libtpu: 0.0.40
codegen_flags: <defaults>
</compile_context>

<pallas_src>
import jax
import jax.numpy as jnp
from jax.experimental import pallas as pl
from jax.experimental.pallas import tpu as pltpu

LN_EPS = 1e-5


def _round_up(x, m):
    return ((x + m - 1) // m) * m


def _vmem_capacity_bytes():
    try:
        return int(pltpu.get_tpu_info().vmem_capacity_bytes)
    except Exception:
        return 64 * 1024 * 1024  # conservative default (v7x per-TC)


def _choose_block_m(B, vmem_cap_bytes, param_bytes):
    """Pick a batch tile: big enough to amortize the ~0.35us/step overhead,
    small enough to bound zero-padding waste, >=2 steps on v7x (2 TCs)."""
    allow_512 = vmem_cap_bytes > (96 << 20) and param_bytes <= (16 << 20)
    cap = 512 if allow_512 else 256
    overhead_rows = 32  # rows-equivalent of the per-grid-step pipeline overhead
    best, best_cost = 8, None
    for bm in (512, 256, 128, 64, 32, 16, 8):
        if bm > cap:
            continue
        b_pad = _round_up(B, bm)
        cost = b_pad + (b_pad // bm) * overhead_rows
        if best_cost is None or cost < best_cost:  # ties prefer larger bm
            best, best_cost = bm, cost
    if vmem_cap_bytes <= (64 << 20):
        # v7x-class part: guarantee >=2 grid steps so the "parallel" batch axis
        # can split across both TensorCores.
        while best > 8 and _round_up(B, best) // best < 2 and _round_up(B, best) >= 16:
            best //= 2
    return best


def make_head_kernel(n_layers, hidden_true, compute_dtype):
    """Fused MLP-head kernel.

    Ref order: x, then per hidden layer i: (W_i, b_i[, gamma_i, beta_i]) where the
    LayerNorm params are present only for i < n_layers - 1, then (W_out, b_out),
    and finally the output ref. Weights are [in, out] bf16; biases/LN params are
    [1, out] f32; all feature dims pre-padded (with zeros) to multiples of 128.
    """
    inv_h = 1.0 / float(hidden_true)

    def kernel(*refs):
        x_ref = refs[0]
        o_ref = refs[-1]
        idx = 1

        h = x_ref[...]  # bf16, padded lanes are zero
        for i in range(n_layers):
            w = refs[idx][...]                          # bf16 [in_pad, H_pad]
            b = refs[idx + 1][...].astype(jnp.float32)  # f32  [1, H_pad]
            idx += 2
            # Linear: bf16 x bf16 -> f32 accumulation on the MXU.
            h = jnp.dot(h, w, preferred_element_type=jnp.float32) + b
            if i < n_layers - 1:
                g = refs[idx][...].astype(jnp.float32)
                beta = refs[idx + 1][...].astype(jnp.float32)
                idx += 2
                # Padded lanes of h are exact zeros (padded W cols / bias are 0),
                # so these sums are exact over the TRUE hidden width: no mask.
                mean = jnp.sum(h, axis=-1, keepdims=True) * inv_h
                ex2 = jnp.sum(h * h, axis=-1, keepdims=True) * inv_h
                var = jnp.maximum(ex2 - mean * mean, 0.0)
                # Padded gamma/beta are 0 -> padded lanes stay exactly 0.
                h = (h - mean) * jax.lax.rsqrt(var + LN_EPS) * g + beta
            # Dropout -> identity in eval mode; ReLU (f32 VPU), then back to bf16
            # so the next matmul runs at full MXU rate.
            h = jnp.maximum(h, 0.0).astype(compute_dtype)

        w_out = refs[idx][...]
        b_out = refs[idx + 1][...].astype(jnp.float32)
        out = jnp.dot(h, w_out, preferred_element_type=jnp.float32) + b_out
        o_ref[...] = out.astype(o_ref.dtype)

    return kernel


def prepare_params(params, *, embed_size, hidden_size, n_layers, num_classes,
                   compute_dtype=jnp.bfloat16):
    """One-time zero-pad + cast of the raw parameter list (keep OUT of the hot
    path; the result can be jitted/cached and reused every forward call)."""
    E_pad = _round_up(embed_size, 128)
    H_pad = _round_up(hidden_size, 128)
    C_pad = _round_up(num_classes, 128)

    padded = []
    idx = 0
    prev_t, prev_p = embed_size, E_pad
    for i in range(n_layers):
        w, b = params[idx], params[idx + 1]
        idx += 2
        wp = jnp.zeros((prev_p, H_pad), compute_dtype).at[:prev_t, :hidden_size].set(
            w.astype(compute_dtype))
        bp = jnp.zeros((1, H_pad), jnp.float32).at[:, :hidden_size].set(
            b.astype(jnp.float32).reshape(1, -1))
        padded += [wp, bp]
        if i < n_layers - 1:  # LayerNorm params (last dropped: last_bn_enable=False)
            g, beta = params[idx], params[idx + 1]
            idx += 2
            gp = jnp.zeros((1, H_pad), jnp.float32).at[:, :hidden_size].set(
                g.astype(jnp.float32).reshape(1, -1))
            btp = jnp.zeros((1, H_pad), jnp.float32).at[:, :hidden_size].set(
                beta.astype(jnp.float32).reshape(1, -1))
            padded += [gp, btp]
        prev_t, prev_p = hidden_size, H_pad
    w_out, b_out = params[idx], params[idx + 1]
    wop = jnp.zeros((H_pad, C_pad), compute_dtype).at[:hidden_size, :num_classes].set(
        w_out.astype(compute_dtype))
    bop = jnp.zeros((1, C_pad), jnp.float32).at[:, :num_classes].set(
        b_out.astype(jnp.float32).reshape(1, -1))
    padded += [wop, bop]
    return padded


def classification_head(x, padded_params, *, n_layers, num_classes, hidden_size,
                        block_m=None, compute_dtype=jnp.bfloat16):
    """x: [B, embed] (f32). padded_params: output of prepare_params()."""
    B, E = x.shape
    out_dtype = x.dtype

    E_pad = _round_up(E, 128)
    H_pad = _round_up(hidden_size, 128)
    C_pad = _round_up(num_classes, 128)

    param_bytes = sum(int(p.size) * p.dtype.itemsize for p in padded_params)
    vmem_cap = _vmem_capacity_bytes()
    if block_m is None:
        block_m = _choose_block_m(B, vmem_cap, param_bytes)
    B_pad = _round_up(B, block_m)

    # Pad + cast the activation (zero padding keeps the math exact).
    x_p = jnp.zeros((B_pad, E_pad), compute_dtype).at[:B, :E].set(x.astype(compute_dtype))

    # ---- specs ----
    grid = (B_pad // block_m,)
    in_specs = [pl.BlockSpec((block_m, E_pad), lambda i: (i, 0))]
    for p in padded_params:
        # Constant index_map -> the whole (small, padded) parameter stays
        # resident; single-buffer it (double-buffering only wastes VMEM).
        in_specs.append(pl.BlockSpec(p.shape, lambda i: (0, 0),
                                     pipeline_mode=pl.Buffered(1)))
    out_spec = pl.BlockSpec((block_m, C_pad), lambda i: (i, 0))

    # Tight VMEM budget: double-buffered x/out blocks + single-buffered params +
    # ~2 live f32 intermediates, capped 12 MiB below physical VMEM capacity.
    block_bytes = block_m * E_pad * 2 + block_m * C_pad * out_dtype.itemsize
    live_f32 = 2 * block_m * max(H_pad, E_pad, C_pad) * 4
    est = 2 * block_bytes + param_bytes + live_f32
    vmem_limit = int(min(vmem_cap - (12 << 20), max(est + (4 << 20), 24 << 20)))
    # TODO(synk): for hidden >= ~4K on v7x (64 MiB VMEM) the resident-weight
    # layout no longer fits; a K-tiled pltpu.emit_pipeline fallback over the
    # weight refs (memory_space=pl.ANY) would be needed for that regime.

    out_p = pl.pallas_call(
        make_head_kernel(n_layers, hidden_size, compute_dtype),
        out_shape=jax.ShapeDtypeStruct((B_pad, C_pad), out_dtype),
        grid_spec=pltpu.PrefetchScalarGridSpec(
            num_scalar_prefetch=0,
            grid=grid,
            in_specs=in_specs,
            out_specs=out_spec,
        ),
        compiler_params=pltpu.CompilerParams(
            dimension_semantics=("parallel",),
            vmem_limit_bytes=vmem_limit,
        ),
    )(x_p, *padded_params)

    return out_p[:B, :num_classes]


def init_params(key, embed_size, hidden_size, n_layers, num_classes, dtype=jnp.float32):
    """Deterministic xavier_normal weights (bias=0, LN gamma=1 beta=0), stored [in, out]."""
    params = []
    prev = embed_size
    for i in range(n_layers):
        key, sub = jax.random.split(key)
        std = (2.0 / (prev + hidden_size)) ** 0.5
        w = (std * jax.random.normal(sub, (prev, hidden_size))).astype(dtype)
        b = jnp.zeros((1, hidden_size), dtype)
        params += [w, b]
        if i < n_layers - 1:  # LayerNorm present (last_bn_enable=False drops the last one)
            params += [jnp.ones((1, hidden_size), dtype), jnp.zeros((1, hidden_size), dtype)]
        prev = hidden_size
    key, sub = jax.random.split(key)
    std = (2.0 / (hidden_size + num_classes)) ** 0.5
    w_out = (std * jax.random.normal(sub, (hidden_size, num_classes))).astype(dtype)
    b_out = jnp.zeros((1, num_classes), dtype)
    params += [w_out, b_out]
    return params


def reference_forward(x, params, n_layers, compute_dtype=jnp.bfloat16):
    """Pure-JAX reference mirroring the PyTorch module (eval mode) with the same
    bf16-operand / f32-accumulate matmul precision as the kernel."""
    def q(a):
        return a.astype(compute_dtype).astype(jnp.float32)

    h = q(x)
    idx = 0
    for i in range(n_layers):
        w, b = params[idx], params[idx + 1]
        idx += 2
        h = h @ q(w) + b.astype(jnp.float32).reshape(1, -1)
        if i < n_layers - 1:
            g, beta = params[idx], params[idx + 1]
            idx += 2
            mean = jnp.mean(h, axis=-1, keepdims=True)
            c = h - mean
            var = jnp.mean(c * c, axis=-1, keepdims=True)
            h = (c * jax.lax.rsqrt(var + LN_EPS) * g.astype(jnp.float32).reshape(1, -1)
                 + beta.astype(jnp.float32).reshape(1, -1))
        h = q(jnp.maximum(h, 0.0))
    w_out, b_out = params[idx], params[idx + 1]
    return h @ q(w_out) + b_out.astype(jnp.float32).reshape(1, -1)


if __name__ == "__main__":
    # Small config: ClassificationHead(embed_size=32, num_classes=8, hidden_size=32, n_layers=2, dp=0.1)
    embed_size, num_classes, hidden_size, n_layers = 32, 8, 32, 2
    B = 16

    key = jax.random.PRNGKey(0)
    key, xk = jax.random.split(key)
    x = jax.random.normal(xk, (B, embed_size), dtype=jnp.float32)

    params = init_params(key, embed_size, hidden_size, n_layers, num_classes)
    padded_params = prepare_params(params, embed_size=embed_size, hidden_size=hidden_size,
                                   n_layers=n_layers, num_classes=num_classes)

    out = classification_head(x, padded_params, n_layers=n_layers,
                              num_classes=num_classes, hidden_size=hidden_size)
    out = jax.block_until_ready(out)

    ref = reference_forward(x, params, n_layers)
    assert out.shape == (B, num_classes)
    assert jnp.allclose(out, ref.astype(out.dtype), atol=1e-2, rtol=1e-2), (
        float(jnp.max(jnp.abs(out - ref.astype(out.dtype)))))

    print("KERNEL_OK")
</pallas_src>

<mosaic_0001>
module attributes {stable_mosaic.version = 11 : i64} {
  func.func @kernel(%arg0: i32, %arg1: memref<8x128xbf16, #tpu.memory_space<vmem>>, %arg2: memref<128x128xbf16, #tpu.memory_space<vmem>>, %arg3: memref<1x128xf32, #tpu.memory_space<vmem>>, %arg4: memref<1x128xf32, #tpu.memory_space<vmem>>, %arg5: memref<1x128xf32, #tpu.memory_space<vmem>>, %arg6: memref<128x128xbf16, #tpu.memory_space<vmem>>, %arg7: memref<1x128xf32, #tpu.memory_space<vmem>>, %arg8: memref<128x128xbf16, #tpu.memory_space<vmem>>, %arg9: memref<1x128xf32, #tpu.memory_space<vmem>>, %arg10: memref<8x128xf32, #tpu.memory_space<vmem>>) attributes {dimension_semantics = [#tpu.dimension_semantics<parallel>], iteration_bounds = array<i64: 2>, scalar_prefetch = 0 : i64, scratch_operands = 0 : i64, tpu.core_type = #tpu.core_type<tc>, window_params = [{transform_indices = @transform_0, window_bounds = array<i64: 8, 128>}, {pipeline_mode = #tpu.pipeline_mode<synchronous>, transform_indices = @transform_1, window_bounds = array<i64: 128, 128>}, {pipeline_mode = #tpu.pipeline_mode<synchronous>, transform_indices = @transform_2, window_bounds = array<i64: 1, 128>}, {pipeline_mode = #tpu.pipeline_mode<synchronous>, transform_indices = @transform_3, window_bounds = array<i64: 1, 128>}, {pipeline_mode = #tpu.pipeline_mode<synchronous>, transform_indices = @transform_4, window_bounds = array<i64: 1, 128>}, {pipeline_mode = #tpu.pipeline_mode<synchronous>, transform_indices = @transform_5, window_bounds = array<i64: 128, 128>}, {pipeline_mode = #tpu.pipeline_mode<synchronous>, transform_indices = @transform_6, window_bounds = array<i64: 1, 128>}, {pipeline_mode = #tpu.pipeline_mode<synchronous>, transform_indices = @transform_7, window_bounds = array<i64: 128, 128>}, {pipeline_mode = #tpu.pipeline_mode<synchronous>, transform_indices = @transform_8, window_bounds = array<i64: 1, 128>}, {transform_indices = @transform_9, window_bounds = array<i64: 8, 128>}]} {
    %c0 = arith.constant 0 : index
    %c0_0 = arith.constant 0 : index
    %0 = vector.load %arg1[%c0, %c0_0] : memref<8x128xbf16, #tpu.memory_space<vmem>>, vector<8x128xbf16>
    %c0_1 = arith.constant 0 : index
    %c0_2 = arith.constant 0 : index
    %1 = vector.load %arg2[%c0_1, %c0_2] : memref<128x128xbf16, #tpu.memory_space<vmem>>, vector<128x128xbf16>
    %c0_3 = arith.constant 0 : index
    %c0_4 = arith.constant 0 : index
    %2 = vector.load %arg3[%c0_3, %c0_4] : memref<1x128xf32, #tpu.memory_space<vmem>>, vector<1x128xf32>
    %cst = arith.constant dense<0.000000e+00> : vector<8x128xf32>
    %3 = tpu.matmul %0, %1, %cst {dimension_numbers = #tpu.dot_dimension_numbers<[1], [0], [0], [1], [0, 0, 1, 1], [], []>} : vector<8x128xbf16>, vector<128x128xbf16>, vector<8x128xf32> -> vector<8x128xf32>
    %4 = vector.broadcast %2 : vector<1x128xf32> to vector<8x128xf32>
    %5 = arith.addf %3, %4 : vector<8x128xf32>
    %c0_5 = arith.constant 0 : index
    %c0_6 = arith.constant 0 : index
    %6 = vector.load %arg4[%c0_5, %c0_6] : memref<1x128xf32, #tpu.memory_space<vmem>>, vector<1x128xf32>
    %c0_7 = arith.constant 0 : index
    %c0_8 = arith.constant 0 : index
    %7 = vector.load %arg5[%c0_7, %c0_8] : memref<1x128xf32, #tpu.memory_space<vmem>>, vector<1x128xf32>
    %cst_9 = arith.constant dense<0.000000e+00> : vector<8xf32>
    %8 = vector.multi_reduction <add>, %5, %cst_9 [1] : vector<8x128xf32> to vector<8xf32>
    %9 = vector.shape_cast %8 : vector<8xf32> to vector<8x1xf32>
    %cst_10 = arith.constant 3.125000e-02 : f32
    %10 = vector.broadcast %cst_10 : f32 to vector<8x1xf32>
    %11 = arith.mulf %9, %10 : vector<8x1xf32>
    %12 = arith.mulf %5, %5 : vector<8x128xf32>
    %cst_11 = arith.constant dense<0.000000e+00> : vector<8xf32>
    %13 = vector.multi_reduction <add>, %12, %cst_11 [1] : vector<8x128xf32> to vector<8xf32>
    %14 = vector.shape_cast %13 : vector<8xf32> to vector<8x1xf32>
    %cst_12 = arith.constant 3.125000e-02 : f32
    %15 = vector.broadcast %cst_12 : f32 to vector<8x1xf32>
    %16 = arith.mulf %14, %15 : vector<8x1xf32>
    %17 = arith.mulf %11, %11 : vector<8x1xf32>
    %18 = arith.subf %16, %17 : vector<8x1xf32>
    %cst_13 = arith.constant 0.000000e+00 : f32
    %19 = vector.broadcast %cst_13 : f32 to vector<8x1xf32>
    %20 = arith.maximumf %18, %19 : vector<8x1xf32>
    %21 = vector.broadcast %11 : vector<8x1xf32> to vector<8x128xf32>
    %22 = arith.subf %5, %21 : vector<8x128xf32>
    %cst_14 = arith.constant 9.99999974E-6 : f32
    %23 = vector.broadcast %cst_14 : f32 to vector<8x1xf32>
    %24 = arith.addf %20, %23 : vector<8x1xf32>
    %25 = math.rsqrt %24 : vector<8x1xf32>
    %26 = vector.broadcast %25 : vector<8x1xf32> to vector<8x128xf32>
    %27 = arith.mulf %22, %26 : vector<8x128xf32>
    %28 = vector.broadcast %6 : vector<1x128xf32> to vector<8x128xf32>
    %29 = arith.mulf %27, %28 : vector<8x128xf32>
    %30 = vector.broadcast %7 : vector<1x128xf32> to vector<8x128xf32>
    %31 = arith.addf %29, %30 : vector<8x128xf32>
    %cst_15 = arith.constant 0.000000e+00 : f32
    %32 = vector.broadcast %cst_15 : f32 to vector<8x128xf32>
    %33 = arith.maximumf %31, %32 : vector<8x128xf32>
    %34 = arith.truncf %33 : vector<8x128xf32> to vector<8x128xbf16>
    %c0_16 = arith.constant 0 : index
    %c0_17 = arith.constant 0 : index
    %35 = vector.load %arg6[%c0_16, %c0_17] : memref<128x128xbf16, #tpu.memory_space<vmem>>, vector<128x128xbf16>
    %c0_18 = arith.constant 0 : index
    %c0_19 = arith.constant 0 : index
    %36 = vector.load %arg7[%c0_18, %c0_19] : memref<1x128xf32, #tpu.memory_space<vmem>>, vector<1x128xf32>
    %cst_20 = arith.constant dense<0.000000e+00> : vector<8x128xf32>
    %37 = tpu.matmul %34, %35, %cst_20 {dimension_numbers = #tpu.dot_dimension_numbers<[1], [0], [0], [1], [0, 0, 1, 1], [], []>} : vector<8x128xbf16>, vector<128x128xbf16>, vector<8x128xf32> -> vector<8x128xf32>
    %38 = vector.broadcast %36 : vector<1x128xf32> to vector<8x128xf32>
    %39 = arith.addf %37, %38 : vector<8x128xf32>
    %cst_21 = arith.constant 0.000000e+00 : f32
    %40 = vector.broadcast %cst_21 : f32 to vector<8x128xf32>
    %41 = arith.maximumf %39, %40 : vector<8x128xf32>
    %42 = arith.truncf %41 : vector<8x128xf32> to vector<8x128xbf16>
    %c0_22 = arith.constant 0 : index
    %c0_23 = arith.constant 0 : index
    %43 = vector.load %arg8[%c0_22, %c0_23] : memref<128x128xbf16, #tpu.memory_space<vmem>>, vector<128x128xbf16>
    %c0_24 = arith.constant 0 : index
    %c0_25 = arith.constant 0 : index
    %44 = vector.load %arg9[%c0_24, %c0_25] : memref<1x128xf32, #tpu.memory_space<vmem>>, vector<1x128xf32>
    %cst_26 = arith.constant dense<0.000000e+00> : vector<8x128xf32>
    %45 = tpu.matmul %42, %43, %cst_26 {dimension_numbers = #tpu.dot_dimension_numbers<[1], [0], [0], [1], [0, 0, 1, 1], [], []>} : vector<8x128xbf16>, vector<128x128xbf16>, vector<8x128xf32> -> vector<8x128xf32>
    %46 = vector.broadcast %44 : vector<1x128xf32> to vector<8x128xf32>
    %47 = arith.addf %45, %46 : vector<8x128xf32>
    %c0_27 = arith.constant 0 : index
    %c0_28 = arith.constant 0 : index
    %48 = vector.load %arg10[%c0_27, %c0_28] : memref<8x128xf32, #tpu.memory_space<vmem>>, vector<8x128xf32>
    tpu.vector_store %arg10[%c0_27, %c0_28], %47 {strides = array<i32>} : memref<8x128xf32, #tpu.memory_space<vmem>>, vector<8x128xf32>,
    return
  }
  func.func @transform_0(%arg0: i32) -> (i32, i32) {
    %c0_i32 = arith.constant 0 : i32
    %c0_i32_0 = arith.constant 0 : i32
    return %arg0, %c0_i32 : i32, i32
  }
  func.func @transform_1(%arg0: i32) -> (i32, i32) {
    %c0_i32 = arith.constant 0 : i32
    %c0_i32_0 = arith.constant 0 : i32
    %c0_i32_1 = arith.constant 0 : i32
    return %c0_i32, %c0_i32_0 : i32, i32
  }
  func.func @transform_2(%arg0: i32) -> (i32, i32) {
    %c0_i32 = arith.constant 0 : i32
    %c0_i32_0 = arith.constant 0 : i32
    %c0_i32_1 = arith.constant 0 : i32
    return %c0_i32, %c0_i32_0 : i32, i32
  }
  func.func @transform_3(%arg0: i32) -> (i32, i32) {
    %c0_i32 = arith.constant 0 : i32
    %c0_i32_0 = arith.constant 0 : i32
    %c0_i32_1 = arith.constant 0 : i32
    return %c0_i32, %c0_i32_0 : i32, i32
  }
  func.func @transform_4(%arg0: i32) -> (i32, i32) {
    %c0_i32 = arith.constant 0 : i32
    %c0_i32_0 = arith.constant 0 : i32
    %c0_i32_1 = arith.constant 0 : i32
    return %c0_i32, %c0_i32_0 : i32, i32
  }
  func.func @transform_5(%arg0: i32) -> (i32, i32) {
    %c0_i32 = arith.constant 0 : i32
    %c0_i32_0 = arith.constant 0 : i32
    %c0_i32_1 = arith.constant 0 : i32
    return %c0_i32, %c0_i32_0 : i32, i32
  }
  func.func @transform_6(%arg0: i32) -> (i32, i32) {
    %c0_i32 = arith.constant 0 : i32
    %c0_i32_0 = arith.constant 0 : i32
    %c0_i32_1 = arith.constant 0 : i32
    return %c0_i32, %c0_i32_0 : i32, i32
  }
  func.func @transform_7(%arg0: i32) -> (i32, i32) {
    %c0_i32 = arith.constant 0 : i32
    %c0_i32_0 = arith.constant 0 : i32
    %c0_i32_1 = arith.constant 0 : i32
    return %c0_i32, %c0_i32_0 : i32, i32
  }
  func.func @transform_8(%arg0: i32) -> (i32, i32) {
    %c0_i32 = arith.constant 0 : i32
    %c0_i32_0 = arith.constant 0 : i32
    %c0_i32_1 = arith.constant 0 : i32
    return %c0_i32, %c0_i32_0 : i32, i32
  }
  func.func @transform_9(%arg0: i32) -> (i32, i32) {
    %c0_i32 = arith.constant 0 : i32
    %c0_i32_0 = arith.constant 0 : i32
    return %arg0, %c0_i32 : i32, i32
  }
}

</mosaic_0001>

<llo_original>
// kernel: tpu_custom_call.1
$region0: #{tpu_custom_call.1}
  #allocation0 [shape = 'u32[]', space=smem, size = 0x4, offset = 0x4, fixed_abs, tag = 'smem constant byte address 0x4 - core index']
  #allocation1 [shape = 'u32[144,128]{1,0:T(1,128)}', space=vmem, size = 0x12000, scoped, tag = 'internal scratch']
  %s0 = inlined_call_operand.hbm [shape: bf16[16,128], index: 0, kind: input, shape index: {}]
  %s1 = inlined_call_operand.hbm [shape: bf16[128,128], index: 1, kind: input, shape index: {}]
  %s2 = inlined_call_operand.vmem [shape: f32[1,128], index: 2, kind: input, shape index: {}]
  %s3 = inlined_call_operand.vmem [shape: f32[1,128], index: 3, kind: input, shape index: {}]
  %s4 = inlined_call_operand.vmem [shape: f32[1,128], index: 4, kind: input, shape index: {}]
  %s5 = inlined_call_operand.hbm [shape: bf16[128,128], index: 5, kind: input, shape index: {}]
  %s6 = inlined_call_operand.vmem [shape: f32[1,128], index: 6, kind: input, shape index: {}]
  %s7 = inlined_call_operand.hbm [shape: bf16[128,128], index: 7, kind: input, shape index: {}]
  %s8 = inlined_call_operand.vmem [shape: f32[1,128], index: 8, kind: input, shape index: {}]
  %s9 = inlined_call_operand.hbm [shape: f32[16,128], index: 9, kind: output, shape index: {}]
  %s10 = sld [smem:[#allocation0]]
  $region85: #{tpu_custom_call.1} parent=0
    _
  %s12 = ssub.s32 1, %s10
  %s13 = scalar_select 0, %s12, %s10
  $region1: #{tpu_custom_call.1} parent=0
    #allocation2 [shape = 'u8[4096]{0}', space=vmem, size = 0x1000, scoped, tag = 'input window, operand 0']
    #allocation3 [shape = 's32[2]{0}', space=sflag, size = 0x8, scoped, tag = 'scoped memory for tpu_custom_call.1']
    #allocation4 [shape = 's32[2]{0}', space=sflag, size = 0x8, scoped, tag = 'scoped memory for tpu_custom_call.1']
    #allocation5 [shape = 'u8[32768]{0}', space=vmem, size = 0x8000, scoped, tag = 'input window, operand 1, single buffered']
    #allocation6 [shape = 's32[1]{0}', space=sflag, size = 0x4, scoped, tag = 'scoped memory for tpu_custom_call.1']
    #allocation7 [shape = 'u8[32768]{0}', space=vmem, size = 0x8000, scoped, tag = 'input window, operand 5, single buffered']
    #allocation8 [shape = 'u8[32768]{0}', space=vmem, size = 0x8000, scoped, tag = 'input window, operand 7, single buffered']
    #allocation9 [shape = 's32[1]{0}', space=sflag, size = 0x4, scoped, tag = 'scoped memory for tpu_custom_call.1']
    #allocation10 [shape = 'u8[8192]{0}', space=vmem, size = 0x2000, scoped, tag = 'output window, operand 0']
    %14 = vsyncpa [#allocation3], 0
    %s15 = scalar_lea.sflag [#allocation3], 1
    %16 = vsyncpa %s15, 0
    %17 = vsyncpa [#allocation6], 0
    %18 = vsyncpa [#allocation9], 0
    %19 = vsyncpa [#allocation4], 0
    %s20 = scalar_lea.sflag [#allocation4], 1
    %21 = vsyncpa %s20, 0
    loop: start=0, step=1, limit=4
    $region2: #{tpu_custom_call.1} parent=1 // loop_pre_header
      _
    $region3: #{tpu_custom_call.1} parent=1 // loop_header
      %s23 = sphi 0, %s27
      %p24 = scmp.ge.s32.totalorder %s23, 4
      %s33 = sphi 0, %s35
      %s36 = sphi 0, %s33
      %s37 = sphi 0, %s36
      %s53 = sphi 0, %s37
      %s57 = sphi 0, %s57
      %s59 = sphi 0, %s57
      %s60 = sphi 0, %s59
      %s74 = sphi 0, %s60
      %s78 = sphi 0, %s78
      %s80 = sphi 0, %s78
      %s81 = sphi 0, %s80
      %s95 = sphi 0, %s81
      %s99 = sphi 0, %s99
      %s101 = sphi 0, %s99
      %s102 = sphi 0, %s101
      %s116 = sphi 0, %s102
      %s120 = sphi 0, %s120
      %s122 = sphi 0, %s120
      %s123 = sphi 0, %s122
      %s137 = sphi 0, %s123
      %s141 = sphi 0, %s141
      %s143 = sphi 0, %s141
      %s144 = sphi 0, %s143
      %s158 = sphi 0, %s144
      %s162 = sphi 0, %s162
      %s164 = sphi 0, %s162
      %s165 = sphi 0, %s164
      %s179 = sphi 0, %s165
      %s183 = sphi 0, %s183
      %s185 = sphi 0, %s183
      %s186 = sphi 0, %s185
      %s200 = sphi 0, %s186
      %s204 = sphi 0, %s204
      %s206 = sphi 0, %s204
      %s207 = sphi 0, %s206
      %s221 = sphi 0, %s207
      %s227 = sphi 0, %s229
      %s230 = sphi 0, %s227
      %s231 = sphi 0, %s230
      %s247 = sphi 0, %s231
    $region4: #{tpu_custom_call.1} parent=1 // loop_header_branch
      %26 = sbr.rel (%p24) target = $region8
    $region5: #{tpu_custom_call.1} parent=1 // loop_body
      %s28 = ssub.s32 %s23, 1
      %s29 = ssub.s32 %s23, 2
      %s30 = sadd.s32 %s23, 1
      %s31 = ssub.s32 %s23, %s30
      %p32 = scmp.eq.s32.totalorder %s31, 0
      %s34 = sadd.s32 %s33, 1
      %s35 = scalar_select %p32, %s33, %s34
      %p38 = pneg %p32
      %p39 = scmp.eq.s32.totalorder %s23, 1
      %p40 = por %p38, %p39
      %p41 = scmp.ne.s32.totalorder %s33, %s36
      %p42 = scmp.eq.s32.totalorder %s23, 0
      %p43 = por %p41, %p42
      %p44 = scmp.ne.s32.totalorder %s33, %s36
      %p45 = scmp.eq.s32.totalorder %s28, 1
      %p46 = por %p44, %p45
      %p47 = scmp.ne.s32.totalorder %s36, %s37
      %p48 = scmp.eq.s32.totalorder %s28, 0
      %p49 = por %p47, %p48
      %p50 = scmp.ne.s32.totalorder %s36, %s37
      %p51 = scmp.eq.s32.totalorder %s29, 1
      %p52 = por %p50, %p51
      %p54 = scmp.ne.s32.totalorder %s37, %s53
      %p55 = scmp.eq.s32.totalorder %s29, 0
      %p56 = por %p54, %p55
      %s58 = sadd.s32 %s57, 1
      %p61 = scmp.eq.s32.totalorder %s23, 1
      %p62 = scmp.ne.s32.totalorder %s57, %s59
      %p63 = scmp.eq.s32.totalorder %s23, 0
      %p64 = por %p62, %p63
      %p65 = scmp.ne.s32.totalorder %s57, %s59
      %p66 = scmp.eq.s32.totalorder %s28, 1
      %p67 = por %p65, %p66
      %p68 = scmp.ne.s32.totalorder %s59, %s60
      %p69 = scmp.eq.s32.totalorder %s28, 0
      %p70 = por %p68, %p69
      %p71 = scmp.ne.s32.totalorder %s59, %s60
      %p72 = scmp.eq.s32.totalorder %s29, 1
      %p73 = por %p71, %p72
      %p75 = scmp.ne.s32.totalorder %s60, %s74
      %p76 = scmp.eq.s32.totalorder %s29, 0
      %p77 = por %p75, %p76
      %s79 = sadd.s32 %s78, 1
      %p82 = scmp.eq.s32.totalorder %s23, 1
      %p83 = scmp.ne.s32.totalorder %s78, %s80
      %p84 = scmp.eq.s32.totalorder %s23, 0
      %p85 = por %p83, %p84
      %p86 = scmp.ne.s32.totalorder %s78, %s80
      %p87 = scmp.eq.s32.totalorder %s28, 1
      %p88 = por %p86, %p87
      %p89 = scmp.ne.s32.totalorder %s80, %s81
      %p90 = scmp.eq.s32.totalorder %s28, 0
      %p91 = por %p89, %p90
      %p92 = scmp.ne.s32.totalorder %s80, %s81
      %p93 = scmp.eq.s32.totalorder %s29, 1
      %p94 = por %p92, %p93
      %p96 = scmp.ne.s32.totalorder %s81, %s95
      %p97 = scmp.eq.s32.totalorder %s29, 0
      %p98 = por %p96, %p97
      %s100 = sadd.s32 %s99, 1
      %p103 = scmp.eq.s32.totalorder %s23, 1
      %p104 = scmp.ne.s32.totalorder %s99, %s101
      %p105 = scmp.eq.s32.totalorder %s23, 0
      %p106 = por %p104, %p105
      %p107 = scmp.ne.s32.totalorder %s99, %s101
      %p108 = scmp.eq.s32.totalorder %s28, 1
      %p109 = por %p107, %p108
      %p110 = scmp.ne.s32.totalorder %s101, %s102
      %p111 = scmp.eq.s32.totalorder %s28, 0
      %p112 = por %p110, %p111
      %p113 = scmp.ne.s32.totalorder %s101, %s102
      %p114 = scmp.eq.s32.totalorder %s29, 1
      %p115 = por %p113, %p114
      %p117 = scmp.ne.s32.totalorder %s102, %s116
      %p118 = scmp.eq.s32.totalorder %s29, 0
      %p119 = por %p117, %p118
      %s121 = sadd.s32 %s120, 1
      %p124 = scmp.eq.s32.totalorder %s23, 1
      %p125 = scmp.ne.s32.totalorder %s120, %s122
      %p126 = scmp.eq.s32.totalorder %s23, 0
      %p127 = por %p125, %p126
      %p128 = scmp.ne.s32.totalorder %s120, %s122
      %p129 = scmp.eq.s32.totalorder %s28, 1
      %p130 = por %p128, %p129
      %p131 = scmp.ne.s32.totalorder %s122, %s123
      %p132 = scmp.eq.s32.totalorder %s28, 0
      %p133 = por %p131, %p132
      %p134 = scmp.ne.s32.totalorder %s122, %s123
      %p135 = scmp.eq.s32.totalorder %s29, 1
      %p136 = por %p134, %p135
      %p138 = scmp.ne.s32.totalorder %s123, %s137
      %p139 = scmp.eq.s32.totalorder %s29, 0
      %p140 = por %p138, %p139
      %s142 = sadd.s32 %s141, 1
      %p145 = scmp.eq.s32.totalorder %s23, 1
      %p146 = scmp.ne.s32.totalorder %s141, %s143
      %p147 = scmp.eq.s32.totalorder %s23, 0
      %p148 = por %p146, %p147
      %p149 = scmp.ne.s32.totalorder %s141, %s143
      %p150 = scmp.eq.s32.totalorder %s28, 1
      %p151 = por %p149, %p150
      %p152 = scmp.ne.s32.totalorder %s143, %s144
      %p153 = scmp.eq.s32.totalorder %s28, 0
      %p154 = por %p152, %p153
      %p155 = scmp.ne.s32.totalorder %s143, %s144
      %p156 = scmp.eq.s32.totalorder %s29, 1
      %p157 = por %p155, %p156
      %p159 = scmp.ne.s32.totalorder %s144, %s158
      %p160 = scmp.eq.s32.totalorder %s29, 0
      %p161 = por %p159, %p160
      %s163 = sadd.s32 %s162, 1
      %p166 = scmp.eq.s32.totalorder %s23, 1
      %p167 = scmp.ne.s32.totalorder %s162, %s164
      %p168 = scmp.eq.s32.totalorder %s23, 0
      %p169 = por %p167, %p168
      %p170 = scmp.ne.s32.totalorder %s162, %s164
      %p171 = scmp.eq.s32.totalorder %s28, 1
      %p172 = por %p170, %p171
      %p173 = scmp.ne.s32.totalorder %s164, %s165
      %p174 = scmp.eq.s32.totalorder %s28, 0
      %p175 = por %p173, %p174
      %p176 = scmp.ne.s32.totalorder %s164, %s165
      %p177 = scmp.eq.s32.totalorder %s29, 1
      %p178 = por %p176, %p177
      %p180 = scmp.ne.s32.totalorder %s165, %s179
      %p181 = scmp.eq.s32.totalorder %s29, 0
      %p182 = por %p180, %p181
      %s184 = sadd.s32 %s183, 1
      %p187 = scmp.eq.s32.totalorder %s23, 1
      %p188 = scmp.ne.s32.totalorder %s183, %s185
      %p189 = scmp.eq.s32.totalorder %s23, 0
      %p190 = por %p188, %p189
      %p191 = scmp.ne.s32.totalorder %s183, %s185
      %p192 = scmp.eq.s32.totalorder %s28, 1
      %p193 = por %p191, %p192
      %p194 = scmp.ne.s32.totalorder %s185, %s186
      %p195 = scmp.eq.s32.totalorder %s28, 0
      %p196 = por %p194, %p195
      %p197 = scmp.ne.s32.totalorder %s185, %s186
      %p198 = scmp.eq.s32.totalorder %s29, 1
      %p199 = por %p197, %p198
      %p201 = scmp.ne.s32.totalorder %s186, %s200
      %p202 = scmp.eq.s32.totalorder %s29, 0
      %p203 = por %p201, %p202
      %s205 = sadd.s32 %s204, 1
      %p208 = scmp.eq.s32.totalorder %s23, 1
      %p209 = scmp.ne.s32.totalorder %s204, %s206
      %p210 = scmp.eq.s32.totalorder %s23, 0
      %p211 = por %p209, %p210
      %p212 = scmp.ne.s32.totalorder %s204, %s206
      %p213 = scmp.eq.s32.totalorder %s28, 1
      %p214 = por %p212, %p213
      %p215 = scmp.ne.s32.totalorder %s206, %s207
      %p216 = scmp.eq.s32.totalorder %s28, 0
      %p217 = por %p215, %p216
      %p218 = scmp.ne.s32.totalorder %s206, %s207
      %p219 = scmp.eq.s32.totalorder %s29, 1
      %p220 = por %p218, %p219
      %p222 = scmp.ne.s32.totalorder %s207, %s221
      %p223 = scmp.eq.s32.totalorder %s29, 0
      %p224 = por %p222, %p223
      %s225 = ssub.s32 %s23, %s30
      %p226 = scmp.eq.s32.totalorder %s225, 0
      %s228 = sadd.s32 %s227, 1
      %s229 = scalar_select %p226, %s227, %s228
      %p232 = pneg %p226
      %p233 = scmp.eq.s32.totalorder %s23, 1
      %p234 = por %p232, %p233
      %p235 = scmp.ne.s32.totalorder %s227, %s230
      %p236 = scmp.eq.s32.totalorder %s23, 0
      %p237 = por %p235, %p236
      %p238 = scmp.ne.s32.totalorder %s227, %s230
      %p239 = scmp.eq.s32.totalorder %s28, 1
      %p240 = por %p238, %p239
      %p241 = scmp.ne.s32.totalorder %s230, %s231
      %p242 = scmp.eq.s32.totalorder %s28, 0
      %p243 = por %p241, %p242
      %p244 = scmp.ne.s32.totalorder %s230, %s231
      %p245 = scmp.eq.s32.totalorder %s29, 1
      %p246 = por %p244, %p245
      %p248 = scmp.ne.s32.totalorder %s231, %s247
      %p249 = scmp.eq.s32.totalorder %s29, 0
      %p250 = por %p248, %p249
      %p251 = scmp.le.s32.totalorder 1, %s23
      %p252 = scmp.lt.s32.totalorder %s23, 3
      %p253 = pnand %p251, %p252
      %p254 = pneg %p253
      // Predicated region
      $region9: #{tpu_custom_call.1} parent=5 // pred_check
        _
      $region10: #{tpu_custom_call.1} parent=5 // pred_check_branch
        %256 = sbr.rel (%p253) target = $region12
      $region11: #{tpu_custom_call.1} parent=5 // pred_region
        %s257 = ssub.s32 %s23, 1
        // Predicated region
        $region13: #{tpu_custom_call.1} parent=11 // pred_check
          %p258 = pneg %p70
        $region14: #{tpu_custom_call.1} parent=11 // pred_check_branch
          %260 = sbr.rel (%p258) target = $region16
        $region15: #{tpu_custom_call.1} parent=11 // pred_region
          %s262 = ssub.s32 1024, 1024
          %263 = vsyncadd [#allocation6], %s262
          %s264 = sshll.u32 [#allocation5], 4
          %s265 = int_to_ptr.vmem [resolvable:$true] %s264
          %270 = dma.hbm_to_vmem [thread:$0]  %s1, 1024, %s265, [#allocation6], 64, 64, 4
        $region16: #{tpu_custom_call.1} parent=11 // pred_fallthru
          _
        // Predicated region
        $region17: #{tpu_custom_call.1} parent=11 // pred_check
          %p271 = pneg %p91
        $region18: #{tpu_custom_call.1} parent=11 // pred_check_branch
          %273 = sbr.rel (%p271) target = $region20
        $region19: #{tpu_custom_call.1} parent=11 // pred_region
          _
        $region20: #{tpu_custom_call.1} parent=11 // pred_fallthru
          _
        // Predicated region
        $region21: #{tpu_custom_call.1} parent=11 // pred_check
          %p274 = pneg %p112
        $region22: #{tpu_custom_call.1} parent=11 // pred_check_branch
          %276 = sbr.rel (%p274) target = $region24
        $region23: #{tpu_custom_call.1} parent=11 // pred_region
          _
        $region24: #{tpu_custom_call.1} parent=11 // pred_fallthru
          _
        // Predicated region
        $region25: #{tpu_custom_call.1} parent=11 // pred_check
          %p277 = pneg %p133
        $region26: #{tpu_custom_call.1} parent=11 // pred_check_branch
          %279 = sbr.rel (%p277) target = $region28
        $region27: #{tpu_custom_call.1} parent=11 // pred_region
          _
        $region28: #{tpu_custom_call.1} parent=11 // pred_fallthru
          _
        // Predicated region
        $region29: #{tpu_custom_call.1} parent=11 // pred_check
          %p280 = pneg %p154
        $region30: #{tpu_custom_call.1} parent=11 // pred_check_branch
          %282 = sbr.rel (%p280) target = $region32
        $region31: #{tpu_custom_call.1} parent=11 // pred_region
          %s284 = ssub.s32 1024, 1024
          %285 = vsyncadd [#allocation6], %s284
          %s286 = sshll.u32 [#allocation7], 4
          %s287 = int_to_ptr.vmem [resolvable:$true] %s286
          %292 = dma.hbm_to_vmem [thread:$0]  %s5, 1024, %s287, [#allocation6], 64, 64, 4
        $region32: #{tpu_custom_call.1} parent=11 // pred_fallthru
          _
        // Predicated region
        $region33: #{tpu_custom_call.1} parent=11 // pred_check
          %p293 = pneg %p175
        $region34: #{tpu_custom_call.1} parent=11 // pred_check_branch
          %295 = sbr.rel (%p293) target = $region36
        $region35: #{tpu_custom_call.1} parent=11 // pred_region
          _
        $region36: #{tpu_custom_call.1} parent=11 // pred_fallthru
          _
        // Predicated region
        $region37: #{tpu_custom_call.1} parent=11 // pred_check
          %p296 = pneg %p196
        $region38: #{tpu_custom_call.1} parent=11 // pred_check_branch
          %298 = sbr.rel (%p296) target = $region40
        $region39: #{tpu_custom_call.1} parent=11 // pred_region
          %s300 = ssub.s32 1024, 1024
          %301 = vsyncadd [#allocation9], %s300
          %s302 = sshll.u32 [#allocation8], 4
          %s303 = int_to_ptr.vmem [resolvable:$true] %s302
          %308 = dma.hbm_to_vmem [thread:$0]  %s7, 1024, %s303, [#allocation9], 64, 64, 4
        $region40: #{tpu_custom_call.1} parent=11 // pred_fallthru
          _
        // Predicated region
        $region41: #{tpu_custom_call.1} parent=11 // pred_check
          %p309 = pneg %p217
        $region42: #{tpu_custom_call.1} parent=11 // pred_check_branch
          %311 = sbr.rel (%p309) target = $region44
        $region43: #{tpu_custom_call.1} parent=11 // pred_region
          _
        $region44: #{tpu_custom_call.1} parent=11 // pred_fallthru
          _
      $region12: #{tpu_custom_call.1} parent=5 // pred_fallthru
        _
      %p312 = scmp.lt.s32.totalorder %s23, 2
      // Predicated region
      $region45: #{tpu_custom_call.1} parent=5 // pred_check
        %p313 = pneg %p312
      $region46: #{tpu_custom_call.1} parent=5 // pred_check_branch
        %315 = sbr.rel (%p313) target = $region48
      $region47: #{tpu_custom_call.1} parent=5 // pred_region
        // Predicated region
        $region49: #{tpu_custom_call.1} parent=47 // pred_check
          %p316 = pneg %p43
        $region50: #{tpu_custom_call.1} parent=47 // pred_check_branch
          %318 = sbr.rel (%p316) target = $region52
        $region51: #{tpu_custom_call.1} parent=47 // pred_region
          %s319 = sand.u32 %s33, 1
          %s320 = scalar_lea.sflag [#allocation3], %s319
          %s321 = sand.u32 %s33, 1
          %s322 = smul.addr %s321, 4
          %s323 = scalar_lea.vmem [#allocation2], %s322
          %s325 = ssub.s32 64, 64
          %326 = vsyncadd %s320, %s325
          %s327 = smul.addr %s23, 64
          %s328 = scalar_lea.hbm %s0, %s327
          %s330 = sshll.u32 %s323, 4
          %s331 = int_to_ptr.vmem [resolvable:$true] %s330
          %333 = dma.hbm_to_vmem [thread:$0]  %s328, 64, %s331, %s320
        $region52: #{tpu_custom_call.1} parent=47 // pred_fallthru
          _
      $region48: #{tpu_custom_call.1} parent=5 // pred_fallthru
        _
      %p334 = scmp.le.s32.totalorder 1, %s23
      %p335 = scmp.lt.s32.totalorder %s23, 3
      %p336 = pnand %p334, %p335
      %p337 = pneg %p336
      // Predicated region
      $region53: #{tpu_custom_call.1} parent=5 // pred_check
        _
      $region54: #{tpu_custom_call.1} parent=5 // pred_check_branch
        %339 = sbr.rel (%p336) target = $region56
      $region55: #{tpu_custom_call.1} parent=5 // pred_region
        %s340 = ssub.s32 %s23, 1
        %s341 = sand.u32 %s36, 1
        %s342 = scalar_lea.sflag [#allocation3], %s341
        %s343 = sand.u32 %s36, 1
        %s344 = smul.addr %s343, 4
        %s345 = scalar_lea.vmem [#allocation2], %s344
        // Predicated region
        $region57: #{tpu_custom_call.1} parent=55 // pred_check
          %p346 = pneg %p49
        $region58: #{tpu_custom_call.1} parent=55 // pred_check_branch
          %348 = sbr.rel (%p346) target = $region60
        $region59: #{tpu_custom_call.1} parent=55 // pred_region
          %349 = dma.done %s342, 64
        $region60: #{tpu_custom_call.1} parent=55 // pred_fallthru
          _
        // Predicated region
        $region61: #{tpu_custom_call.1} parent=55 // pred_check
          %p350 = pneg %p70
        $region62: #{tpu_custom_call.1} parent=55 // pred_check_branch
          %352 = sbr.rel (%p350) target = $region64
        $region63: #{tpu_custom_call.1} parent=55 // pred_region
          %353 = dma.done [#allocation6], 1024
        $region64: #{tpu_custom_call.1} parent=55 // pred_fallthru
          _
        // Predicated region
        $region65: #{tpu_custom_call.1} parent=55 // pred_check
          %p354 = pneg %p154
        $region66: #{tpu_custom_call.1} parent=55 // pred_check_branch
          %356 = sbr.rel (%p354) target = $region68
        $region67: #{tpu_custom_call.1} parent=55 // pred_region
          %357 = dma.done [#allocation6], 1024
        $region68: #{tpu_custom_call.1} parent=55 // pred_fallthru
          _
        // Predicated region
        $region69: #{tpu_custom_call.1} parent=55 // pred_check
          %p358 = pneg %p196
        $region70: #{tpu_custom_call.1} parent=55 // pred_check_branch
          %360 = sbr.rel (%p358) target = $region72
        $region71: #{tpu_custom_call.1} parent=55 // pred_region
          %361 = dma.done [#allocation9], 1024
        $region72: #{tpu_custom_call.1} parent=55 // pred_fallthru
          _
        %s362 = sand.u32 %s36, 1
        %s363 = scalar_lea.sflag [#allocation3], %s362
        %s364 = sand.u32 %s36, 1
        %s365 = smul.addr %s364, 4
        %s366 = scalar_lea.vmem [#allocation2], %s365
        %p367 = pneg %p49
        %p368 = pneg %p46
        %p369 = pneg %p70
        %p370 = pneg %p67
        %p371 = pneg %p91
        %p372 = pneg %p88
        %p373 = pneg %p112
        %p374 = pneg %p109
        %p375 = pneg %p133
        %p376 = pneg %p130
        %p377 = pneg %p154
        %p378 = pneg %p151
        %p379 = pneg %p175
        %p380 = pneg %p172
        %p381 = pneg %p196
        %p382 = pneg %p193
        %p383 = pneg %p217
        %p384 = pneg %p214
        %p385 = pneg %p243
        %p386 = pneg %p240
        %s387 = sand.u32 %s230, 1
        %s388 = scalar_lea.sflag [#allocation4], %s387
        %s389 = sand.u32 %s230, 1
        %s390 = smul.addr %s389, 8
        %s391 = scalar_lea.vmem [#allocation10], %s390
        %v393 = vld [vmem:[%s345] sm:$0xf]
        %v394 = vld [vmem:[#allocation5] sm:$0xf]
        %v395 = vld [vmem:[#allocation5 + $0x4] sm:$0xf]
        %v396 = vld [vmem:[#allocation5 + $0x8] sm:$0xf]
        %v397 = vld [vmem:[#allocation5 + $0xc] sm:$0xf]
        %v398 = vld [vmem:[#allocation5 + $0x10] sm:$0xf]
        %v399 = vld [vmem:[#allocation5 + $0x14] sm:$0xf]
        %v400 = vld [vmem:[#allocation5 + $0x18] sm:$0xf]
        %v401 = vld [vmem:[#allocation5 + $0x1c] sm:$0xf]
        %v402 = vld [vmem:[#allocation5 + $0x20] sm:$0xf]
        %v403 = vld [vmem:[#allocation5 + $0x24] sm:$0xf]
        %v404 = vld [vmem:[#allocation5 + $0x28] sm:$0xf]
        %v405 = vld [vmem:[#allocation5 + $0x2c] sm:$0xf]
        %v406 = vld [vmem:[#allocation5 + $0x30] sm:$0xf]
        %v407 = vld [vmem:[#allocation5 + $0x34] sm:$0xf]
        %v408 = vld [vmem:[#allocation5 + $0x38] sm:$0xf]
        %v409 = vld [vmem:[#allocation5 + $0x3c] sm:$0xf]
        %v410 = vld [vmem:[%s2] sm:$0x1]
        %v412 = vlaneseq
        %v413 = vshrl.u32 %v412, 7
        %v414 = vsub.s32 0, %v413
        %v415 = vrot.slane %v410, %v414
        %v433 = vunpack.c.l.b16 %v394
        %v434 = vunpack.c.l.b16 %v395
        %v435 = vunpack.c.l.b16 %v396
        %v436 = vunpack.c.l.b16 %v397
        %v437 = vunpack.c.l.b16 %v398
        %v438 = vunpack.c.l.b16 %v399
        %v439 = vunpack.c.l.b16 %v400
        %v440 = vunpack.c.l.b16 %v401
        %v441 = vunpack.c.l.b16 %v402
        %v442 = vunpack.c.l.b16 %v403
        %v443 = vunpack.c.l.b16 %v404
        %v444 = vunpack.c.l.b16 %v405
        %v445 = vunpack.c.l.b16 %v406
        %v446 = vunpack.c.l.b16 %v407
        %v447 = vunpack.c.l.b16 %v408
        %v448 = vunpack.c.l.b16 %v409
        %v449 = vpack.c.b16 %v434, %v433
        %v450 = vpack.c.b16 %v436, %v435
        %v451 = vpack.c.b16 %v438, %v437
        %v452 = vpack.c.b16 %v440, %v439
        %v453 = vpack.c.b16 %v442, %v441
        %v454 = vpack.c.b16 %v444, %v443
        %v455 = vpack.c.b16 %v446, %v445
        %v456 = vpack.c.b16 %v448, %v447
        %465 = vmatprep.subr.bf16.mxu0 0
        %466 = vmatpush1.bf16.msra.mxu0 %v456
        %467 = vmatprep.subr.bf16.mxu0 0
        %468 = vmatpush1.bf16.msra.mxu0 %v455
        %469 = vmatprep.subr.bf16.mxu0 0
        %470 = vmatpush1.bf16.msra.mxu0 %v454
        %471 = vmatprep.subr.bf16.mxu0 0
        %472 = vmatpush1.bf16.msra.mxu0 %v453
        %473 = vmatprep.subr.bf16.mxu0 0
        %474 = vmatpush1.bf16.msra.mxu0 %v452
        %475 = vmatprep.subr.bf16.mxu0 0
        %476 = vmatpush1.bf16.msra.mxu0 %v451
        %477 = vmatprep.subr.bf16.mxu0 0
        %478 = vmatpush1.bf16.msra.mxu0 %v450
        %479 = vmatprep.subr.bf16.mxu0 0
        %480 = vmatpush1.bf16.msra.mxu0 %v449
        %481 = vmatprep.subr.bf16.mxu0 0
        %482 = vmatpush2.bf16.msra.mxu0 0
        %483 = vmatprep.subr.bf16.mxu0 0
        %484 = vmatpush2.bf16.msra.mxu0 0
        %485 = vmatprep.subr.bf16.mxu0 0
        %486 = vmatpush2.bf16.msra.mxu0 0
        %487 = vmatprep.subr.bf16.mxu0 0
        %488 = vmatpush2.bf16.msra.mxu0 0
        %489 = vmatprep.subr.bf16.mxu0 0
        %490 = vmatpush2.bf16.msra.mxu0 0
        %491 = vmatprep.subr.bf16.mxu0 0
        %492 = vmatpush2.bf16.msra.mxu0 0
        %493 = vmatprep.subr.bf16.mxu0 0
        %494 = vmatpush2.bf16.msra.mxu0 0
        %495 = vmatprep.subr.bf16.mxu0 0
        %496 = vmatpush2.bf16.msra.mxu0 0
        %497 = vmatprep.mubr.bf16.mxu0 0
        %498 = vmatmul.mubr.bf16.gmra.mxu0 %v393
        %v499 = vpop.f32.mrf.mxu0
        %v500 = vadd.f32 %v415, %v499
        %v501 = vpop.f32.mrf.mxu0
        %v502 = vpop.f32.mrf.mxu0
        %v503 = vpop.f32.mrf.mxu0
        %504 = vdwg.mxu0
        %v505 = vld [vmem:[%s3] sm:$0x1]
        %v506 = vld [vmem:[%s4] sm:$0x1]
        %507 = vadd.xlane.f32.xlu0 %v500
        %v508 = vpop.xlane.xlu0 %507
        %v509 = vmul.f32 %v508, 0.03125
        %v510 = vmul.f32 %v500, %v500
        %511 = vadd.xlane.f32.xlu0 %v510
        %v512 = vpop.xlane.xlu0 %511
        %v513 = vmul.f32 %v512, 0.03125
        %v514 = vmul.f32 %v509, %v509
        %v515 = vsub.f32 %v513, %v514
        %v516 = vmax.f32 %v515, 0.0
        %v517 = vsub.f32 %v500, %v509
        %v518 = vadd.f32 %v516, 1e-05
        %v519 = vrsqrt.pop %v518
        %v520 = vmul.f32 %v517, %v519
        %v522 = vlaneseq
        %v523 = vshrl.u32 %v522, 7
        %v524 = vsub.s32 0, %v523
        %v525 = vrot.slane %v505, %v524
        %v527 = vmul.f32 %v520, %v525
        %v529 = vlaneseq
        %v530 = vshrl.u32 %v529, 7
        %v531 = vsub.s32 0, %v530
        %v532 = vrot.slane %v506, %v531
        %v534 = vadd.f32 %v527, %v532
        %v535 = vmax.f32 %v534, 0.0
        %v536 = vpack.c.bf16 %v535, %v535
        %v537 = vld [vmem:[#allocation7] sm:$0xf]
        %v538 = vld [vmem:[#allocation7 + $0x4] sm:$0xf]
        %v539 = vld [vmem:[#allocation7 + $0x8] sm:$0xf]
        %v540 = vld [vmem:[#allocation7 + $0xc] sm:$0xf]
        %v541 = vld [vmem:[#allocation7 + $0x10] sm:$0xf]
        %v542 = vld [vmem:[#allocation7 + $0x14] sm:$0xf]
        %v543 = vld [vmem:[#allocation7 + $0x18] sm:$0xf]
        %v544 = vld [vmem:[#allocation7 + $0x1c] sm:$0xf]
        %v545 = vld [vmem:[#allocation7 + $0x20] sm:$0xf]
        %v546 = vld [vmem:[#allocation7 + $0x24] sm:$0xf]
        %v547 = vld [vmem:[#allocation7 + $0x28] sm:$0xf]
        %v548 = vld [vmem:[#allocation7 + $0x2c] sm:$0xf]
        %v549 = vld [vmem:[#allocation7 + $0x30] sm:$0xf]
        %v550 = vld [vmem:[#allocation7 + $0x34] sm:$0xf]
        %v551 = vld [vmem:[#allocation7 + $0x38] sm:$0xf]
        %v552 = vld [vmem:[#allocation7 + $0x3c] sm:$0xf]
        %v553 = vld [vmem:[%s6] sm:$0x1]
        %v555 = vlaneseq
        %v556 = vshrl.u32 %v555, 7
        %v557 = vsub.s32 0, %v556
        %v558 = vrot.slane %v553, %v557
        %v576 = vunpack.c.l.b16 %v537
        %v577 = vunpack.c.l.b16 %v538
        %v578 = vunpack.c.l.b16 %v539
        %v579 = vunpack.c.l.b16 %v540
        %v580 = vunpack.c.l.b16 %v541
        %v581 = vunpack.c.l.b16 %v542
        %v582 = vunpack.c.l.b16 %v543
        %v583 = vunpack.c.l.b16 %v544
        %v584 = vunpack.c.l.b16 %v545
        %v585 = vunpack.c.l.b16 %v546
        %v586 = vunpack.c.l.b16 %v547
        %v587 = vunpack.c.l.b16 %v548
        %v588 = vunpack.c.l.b16 %v549
        %v589 = vunpack.c.l.b16 %v550
        %v590 = vunpack.c.l.b16 %v551
        %v591 = vunpack.c.l.b16 %v552
        %v592 = vpack.c.b16 %v577, %v576
        %v593 = vpack.c.b16 %v579, %v578
        %v594 = vpack.c.b16 %v581, %v580
        %v595 = vpack.c.b16 %v583, %v582
        %v596 = vpack.c.b16 %v585, %v584
        %v597 = vpack.c.b16 %v587, %v586
        %v598 = vpack.c.b16 %v589, %v588
        %v599 = vpack.c.b16 %v591, %v590
        %608 = vmatprep.subr.bf16.mxu0 0
        %609 = vmatpush1.bf16.msra.mxu0 %v599
        %610 = vmatprep.subr.bf16.mxu0 0
        %611 = vmatpush1.bf16.msra.mxu0 %v598
        %612 = vmatprep.subr.bf16.mxu0 0
        %613 = vmatpush1.bf16.msra.mxu0 %v597
        %614 = vmatprep.subr.bf16.mxu0 0
        %615 = vmatpush1.bf16.msra.mxu0 %v596
        %616 = vmatprep.subr.bf16.mxu0 0
        %617 = vmatpush1.bf16.msra.mxu0 %v595
        %618 = vmatprep.subr.bf16.mxu0 0
        %619 = vmatpush1.bf16.msra.mxu0 %v594
        %620 = vmatprep.subr.bf16.mxu0 0
        %621 = vmatpush1.bf16.msra.mxu0 %v593
        %622 = vmatprep.subr.bf16.mxu0 0
        %623 = vmatpush1.bf16.msra.mxu0 %v592
        %624 = vmatprep.subr.bf16.mxu0 0
        %625 = vmatpush2.bf16.msra.mxu0 0
        %626 = vmatprep.subr.bf16.mxu0 0
        %627 = vmatpush2.bf16.msra.mxu0 0
        %628 = vmatprep.subr.bf16.mxu0 0
        %629 = vmatpush2.bf16.msra.mxu0 0
        %630 = vmatprep.subr.bf16.mxu0 0
        %631 = vmatpush2.bf16.msra.mxu0 0
        %632 = vmatprep.subr.bf16.mxu0 0
        %633 = vmatpush2.bf16.msra.mxu0 0
        %634 = vmatprep.subr.bf16.mxu0 0
        %635 = vmatpush2.bf16.msra.mxu0 0
        %636 = vmatprep.subr.bf16.mxu0 0
        %637 = vmatpush2.bf16.msra.mxu0 0
        %638 = vmatprep.subr.bf16.mxu0 0
        %639 = vmatpush2.bf16.msra.mxu0 0
        %640 = vmatprep.mubr.bf16.mxu0 0
        %641 = vmatmul.mubr.bf16.gmra.mxu0 %v536
        %v642 = vpop.f32.mrf.mxu0
        %v643 = vadd.f32 %v558, %v642
        %v644 = vpop.f32.mrf.mxu0
        %v645 = vpop.f32.mrf.mxu0
        %v646 = vpop.f32.mrf.mxu0
        %647 = vdwg.mxu0
        %v648 = vmax.f32 %v643, 0.0
        %v649 = vpack.c.bf16 %v648, %v648
        %v650 = vld [vmem:[#allocation8] sm:$0xf]
        %v651 = vld [vmem:[#allocation8 + $0x4] sm:$0xf]
        %v652 = vld [vmem:[#allocation8 + $0x8] sm:$0xf]
        %v653 = vld [vmem:[#allocation8 + $0xc] sm:$0xf]
        %v654 = vld [vmem:[#allocation8 + $0x10] sm:$0xf]
        %v655 = vld [vmem:[#allocation8 + $0x14] sm:$0xf]
        %v656 = vld [vmem:[#allocation8 + $0x18] sm:$0xf]
        %v657 = vld [vmem:[#allocation8 + $0x1c] sm:$0xf]
        %v658 = vld [vmem:[#allocation8 + $0x20] sm:$0xf]
        %v659 = vld [vmem:[#allocation8 + $0x24] sm:$0xf]
        %v660 = vld [vmem:[#allocation8 + $0x28] sm:$0xf]
        %v661 = vld [vmem:[#allocation8 + $0x2c] sm:$0xf]
        %v662 = vld [vmem:[#allocation8 + $0x30] sm:$0xf]
        %v663 = vld [vmem:[#allocation8 + $0x34] sm:$0xf]
        %v664 = vld [vmem:[#allocation8 + $0x38] sm:$0xf]
        %v665 = vld [vmem:[#allocation8 + $0x3c] sm:$0xf]
        %v666 = vld [vmem:[%s8] sm:$0x1]
        %v668 = vlaneseq
        %v669 = vshrl.u32 %v668, 7
        %v670 = vsub.s32 0, %v669
        %v671 = vrot.slane %v666, %v670
        %v689 = vunpack.c.l.b16 %v650
        %v690 = vunpack.c.l.b16 %v651
        %v691 = vunpack.c.l.b16 %v652
        %v692 = vunpack.c.l.b16 %v653
        %v693 = vunpack.c.l.b16 %v654
        %v694 = vunpack.c.l.b16 %v655
        %v695 = vunpack.c.l.b16 %v656
        %v696 = vunpack.c.l.b16 %v657
        %v697 = vunpack.c.l.b16 %v658
        %v698 = vunpack.c.l.b16 %v659
        %v699 = vunpack.c.l.b16 %v660
        %v700 = vunpack.c.l.b16 %v661
        %v701 = vunpack.c.l.b16 %v662
        %v702 = vunpack.c.l.b16 %v663
        %v703 = vunpack.c.l.b16 %v664
        %v704 = vunpack.c.l.b16 %v665
        %v705 = vpack.c.b16 %v690, %v689
        %v706 = vpack.c.b16 %v692, %v691
        %v707 = vpack.c.b16 %v694, %v693
        %v708 = vpack.c.b16 %v696, %v695
        %v709 = vpack.c.b16 %v698, %v697
        %v710 = vpack.c.b16 %v700, %v699
        %v711 = vpack.c.b16 %v702, %v701
        %v712 = vpack.c.b16 %v704, %v703
        %721 = vmatprep.subr.bf16.mxu0 0
        %722 = vmatpush1.bf16.msra.mxu0 %v712
        %723 = vmatprep.subr.bf16.mxu0 0
        %724 = vmatpush1.bf16.msra.mxu0 %v711
        %725 = vmatprep.subr.bf16.mxu0 0
        %726 = vmatpush1.bf16.msra.mxu0 %v710
        %727 = vmatprep.subr.bf16.mxu0 0
        %728 = vmatpush1.bf16.msra.mxu0 %v709
        %729 = vmatprep.subr.bf16.mxu0 0
        %730 = vmatpush1.bf16.msra.mxu0 %v708
        %731 = vmatprep.subr.bf16.mxu0 0
        %732 = vmatpush1.bf16.msra.mxu0 %v707
        %733 = vmatprep.subr.bf16.mxu0 0
        %734 = vmatpush1.bf16.msra.mxu0 %v706
        %735 = vmatprep.subr.bf16.mxu0 0
        %736 = vmatpush1.bf16.msra.mxu0 %v705
        %737 = vmatprep.subr.bf16.mxu0 0
        %738 = vmatpush2.bf16.msra.mxu0 0
        %739 = vmatprep.subr.bf16.mxu0 0
        %740 = vmatpush2.bf16.msra.mxu0 0
        %741 = vmatprep.subr.bf16.mxu0 0
        %742 = vmatpush2.bf16.msra.mxu0 0
        %743 = vmatprep.subr.bf16.mxu0 0
        %744 = vmatpush2.bf16.msra.mxu0 0
        %745 = vmatprep.subr.bf16.mxu0 0
        %746 = vmatpush2.bf16.msra.mxu0 0
        %747 = vmatprep.subr.bf16.mxu0 0
        %748 = vmatpush2.bf16.msra.mxu0 0
        %749 = vmatprep.subr.bf16.mxu0 0
        %750 = vmatpush2.bf16.msra.mxu0 0
        %751 = vmatprep.subr.bf16.mxu0 0
        %752 = vmatpush2.bf16.msra.mxu0 0
        %753 = vmatprep.mubr.bf16.mxu0 0
        %754 = vmatmul.mubr.bf16.gmra.mxu0 %v649
        %v755 = vpop.f32.mrf.mxu0
        %v756 = vadd.f32 %v671, %v755
        %v757 = vpop.f32.mrf.mxu0
        %v758 = vpop.f32.mrf.mxu0
        %v759 = vpop.f32.mrf.mxu0
        %760 = vdwg.mxu0
        %761 = vst [vmem:[%s391] sm:$0xff] %v756
        %s762 = sand.u32 %s230, 1
        %s763 = scalar_lea.sflag [#allocation4], %s762
        %s764 = sand.u32 %s230, 1
        %s765 = smul.addr %s764, 8
        %s766 = scalar_lea.vmem [#allocation10], %s765
        // Predicated region
        $region73: #{tpu_custom_call.1} parent=55 // pred_check
          %p767 = pneg %p240
        $region74: #{tpu_custom_call.1} parent=55 // pred_check_branch
          %769 = sbr.rel (%p767) target = $region76
        $region75: #{tpu_custom_call.1} parent=55 // pred_region
          %s771 = ssub.s32 128, 128
          %772 = vsyncadd %s763, %s771
          %s773 = smul.addr %s28, 128
          %s774 = scalar_lea.hbm %s9, %s773
          %s776 = sshll.u32 %s766, 4
          %s777 = int_to_ptr.vmem [resolvable:$true] %s776
          %779 = dma.vmem_to_hbm [thread:$0]  %s777, 128, %s774, %s763
        $region76: #{tpu_custom_call.1} parent=55 // pred_fallthru
          _
      $region56: #{tpu_custom_call.1} parent=5 // pred_fallthru
        _
      %p780 = scmp.le.s32.totalorder 2, %s23
      // Predicated region
      $region77: #{tpu_custom_call.1} parent=5 // pred_check
        %p781 = pneg %p780
      $region78: #{tpu_custom_call.1} parent=5 // pred_check_branch
        %783 = sbr.rel (%p781) target = $region80
      $region79: #{tpu_custom_call.1} parent=5 // pred_region
        %s784 = ssub.s32 %s23, 2
        // Predicated region
        $region81: #{tpu_custom_call.1} parent=79 // pred_check
          %p785 = pneg %p246
        $region82: #{tpu_custom_call.1} parent=79 // pred_check_branch
          %787 = sbr.rel (%p785) target = $region84
        $region83: #{tpu_custom_call.1} parent=79 // pred_region
          %s788 = sand.u32 %s231, 1
          %s789 = scalar_lea.sflag [#allocation4], %s788
          %s790 = sand.u32 %s231, 1
          %s791 = smul.addr %s790, 8
          %s792 = scalar_lea.vmem [#allocation10], %s791
          %793 = dma.done %s789, 128
        $region84: #{tpu_custom_call.1} parent=79 // pred_fallthru
          _
      $region80: #{tpu_custom_call.1} parent=5 // pred_fallthru
        _
    $region6: #{tpu_custom_call.1} parent=1 // loop_footer
      %s27 = sadd.s32 1, %s23
    $region7: #{tpu_custom_call.1} parent=1 // loop_footer_branch
      %22 = sbr.rel target = $region3
    $region8: #{tpu_custom_call.1} parent=1 // loop_exit
      _
    %794 = vsyncpa [#allocation3], 1
    %s795 = scalar_lea.sflag [#allocation3], 1
    %796 = vsyncpa %s795, 1
    %797 = vsyncpa [#allocation6], 1
    %798 = vsyncpa [#allocation9], 1
    %799 = vsyncpa [#allocation4], 1
    %s800 = scalar_lea.sflag [#allocation4], 1
    %801 = vsyncpa %s800, 1

</llo_original>
